<compile_context>
chip_gen: v7x
topology: tpu7x:2x2x1
jax: 0.10.0
libtpu: 0.0.40
codegen_flags: <defaults>
</compile_context>

<pallas_src>
import functools

import jax
import jax.numpy as jnp
import numpy as np
from jax.experimental import pallas as pl
from jax.experimental.pallas import tpu as pltpu


def _tsm_kernel(x_ref, o_ref, *, fold):
    # x_ref / o_ref block shape: (1, T, C, TILE_HW)
    _, T, C, HW = x_ref.shape
    f2 = 2 * fold

    if fold > 0:
        # Channels [0, fold): shift "left" in time  (out[t] = x[t+1], last t -> 0)
        for t in range(T - 1):
            o_ref[0, t, :fold, :] = x_ref[0, t + 1, :fold, :]
        o_ref[0, T - 1, :fold, :] = jnp.zeros((fold, HW), o_ref.dtype)

        # Channels [fold, 2*fold): shift "right" in time (out[t] = x[t-1], first t -> 0)
        for t in range(1, T):
            o_ref[0, t, fold:f2, :] = x_ref[0, t - 1, fold:f2, :]
        o_ref[0, 0, fold:f2, :] = jnp.zeros((fold, HW), o_ref.dtype)

    # Channels [2*fold, C): identity copy.
    # TODO(synk): could be skipped entirely via input_output_aliases (donated
    # input) to cut ~1/3 of HBM traffic; kept as an explicit copy for safety.
    if f2 < C:
        for t in range(T):
            o_ref[0, t, f2:, :] = x_ref[0, t, f2:, :]


def _choose_tile_hw(HW, T, C, itemsize, budget_bytes=4 << 20):
    """Pick a lane-axis tile: a multiple of 128 (unmasked vst) sized to a VMEM budget."""
    slab = max(1, T * C * itemsize)          # bytes per lane column of the block
    if HW % 128 == 0:
        tile = min(HW, max(128, (budget_bytes // slab) // 128 * 128))
        while HW % tile != 0:                # prefer evenly-dividing tiles
            tile -= 128
        return tile
    if HW * slab <= budget_bytes:            # small / odd HW: full extent is legal
        return HW
    # Large, non-128-multiple HW: 128-multiple tile; Pallas masks the ragged edge.
    return max(128, (budget_bytes // slab) // 128 * 128)


def tsm_forward(x, num_segments, fold_div=3):
    """Pallas implementation of TSM.forward.

    x: (B*T, C, H, W) array.  Returns an array of the same shape/dtype.
    """
    BT, C, H, W = x.shape
    assert BT % num_segments == 0
    B = BT // num_segments
    T = num_segments
    HW = H * W
    fold = C // fold_div

    x_r = x.reshape(B, T, C, HW)

    itemsize = jnp.dtype(x.dtype).itemsize
    tile_hw = _choose_tile_hw(HW, T, C, itemsize)
    n_hw = pl.cdiv(HW, tile_hw)

    out = pl.pallas_call(
        functools.partial(_tsm_kernel, fold=fold),
        out_shape=jax.ShapeDtypeStruct((B, T, C, HW), x.dtype),
        grid=(B, n_hw),
        in_specs=[pl.BlockSpec((1, T, C, tile_hw), lambda b, h: (b, 0, 0, h))],
        out_specs=pl.BlockSpec((1, T, C, tile_hw), lambda b, h: (b, 0, 0, h)),
        compiler_params=pltpu.CompilerParams(
            dimension_semantics=("parallel", "parallel"),
            vmem_limit_bytes=48 * 1024 * 1024,
        ),
    )(x_r)

    return out.reshape(BT, C, H, W)


def _tsm_reference(x, num_segments, fold_div=3):
    """Pure-JAX reference mirroring the PyTorch code exactly."""
    BT, C, H, W = x.shape
    B = BT // num_segments
    xv = x.reshape(B, num_segments, C, H, W)
    fold = C // fold_div
    out = jnp.zeros_like(xv)
    out = out.at[:, :-1, :fold].set(xv[:, 1:, :fold])
    out = out.at[:, 1:, fold:2 * fold].set(xv[:, :-1, fold:2 * fold])
    out = out.at[:, :, 2 * fold:].set(xv[:, :, 2 * fold:])
    return out.reshape(BT, C, H, W)


if __name__ == "__main__":
    # TSM has no learnable parameters; only num_segments / fold_div hyperparams.
    num_segments = 4
    fold_div = 3
    B, C, H, W = 2, 6, 16, 16          # kernel input: (B*T, C, H, W) = (8, 6, 16, 16)

    key = jax.random.PRNGKey(0)
    x = jax.random.normal(key, (B * num_segments, C, H, W), dtype=jnp.float32)

    y = tsm_forward(x, num_segments, fold_div)
    y = jax.block_until_ready(y)

    y_ref = _tsm_reference(x, num_segments, fold_div)
    assert y.shape == x.shape and y.dtype == x.dtype
    np.testing.assert_allclose(np.asarray(y), np.asarray(y_ref), atol=0.0, rtol=0.0)

    print("KERNEL_OK")
</pallas_src>

<mosaic_0001>
module attributes {stable_mosaic.version = 11 : i64} {
  func.func @_tsm_kernel(%arg0: i32, %arg1: i32, %arg2: memref<1x4x6x256xf32, #tpu.memory_space<vmem>>, %arg3: memref<1x4x6x256xf32, #tpu.memory_space<vmem>>) attributes {dimension_semantics = [#tpu.dimension_semantics<parallel>, #tpu.dimension_semantics<parallel>], iteration_bounds = array<i64: 2, 1>, scalar_prefetch = 0 : i64, scratch_operands = 0 : i64, tpu.core_type = #tpu.core_type<tc>, window_params = [{transform_indices = @transform_0, window_bounds = array<i64: 1, 4, 6, 256>}, {transform_indices = @transform_1, window_bounds = array<i64: 1, 4, 6, 256>}]} {
    %c0 = arith.constant 0 : index
    %c1 = arith.constant 1 : index
    %c0_0 = arith.constant 0 : index
    %c0_1 = arith.constant 0 : index
    %0 = vector.load %arg2[%c0, %c1, %c0_0, %c0_1] : memref<1x4x6x256xf32, #tpu.memory_space<vmem>>, vector<1x1x2x256xf32>
    %1 = vector.shape_cast %0 : vector<1x1x2x256xf32> to vector<2x256xf32>
    %c0_2 = arith.constant 0 : index
    %c0_3 = arith.constant 0 : index
    %c0_4 = arith.constant 0 : index
    %c0_5 = arith.constant 0 : index
    %2 = vector.load %arg3[%c0_2, %c0_3, %c0_4, %c0_5] : memref<1x4x6x256xf32, #tpu.memory_space<vmem>>, vector<1x1x2x256xf32>
    %3 = vector.shape_cast %2 : vector<1x1x2x256xf32> to vector<2x256xf32>
    %4 = vector.shape_cast %1 : vector<2x256xf32> to vector<1x1x2x256xf32>
    tpu.vector_store %arg3[%c0_2, %c0_3, %c0_4, %c0_5], %4 {strides = array<i32>} : memref<1x4x6x256xf32, #tpu.memory_space<vmem>>, vector<1x1x2x256xf32>,
    %c0_6 = arith.constant 0 : index
    %c2 = arith.constant 2 : index
    %c0_7 = arith.constant 0 : index
    %c0_8 = arith.constant 0 : index
    %5 = vector.load %arg2[%c0_6, %c2, %c0_7, %c0_8] : memref<1x4x6x256xf32, #tpu.memory_space<vmem>>, vector<1x1x2x256xf32>
    %6 = vector.shape_cast %5 : vector<1x1x2x256xf32> to vector<2x256xf32>
    %c0_9 = arith.constant 0 : index
    %c1_10 = arith.constant 1 : index
    %c0_11 = arith.constant 0 : index
    %c0_12 = arith.constant 0 : index
    %7 = vector.load %arg3[%c0_9, %c1_10, %c0_11, %c0_12] : memref<1x4x6x256xf32, #tpu.memory_space<vmem>>, vector<1x1x2x256xf32>
    %8 = vector.shape_cast %7 : vector<1x1x2x256xf32> to vector<2x256xf32>
    %9 = vector.shape_cast %6 : vector<2x256xf32> to vector<1x1x2x256xf32>
    tpu.vector_store %arg3[%c0_9, %c1_10, %c0_11, %c0_12], %9 {strides = array<i32>} : memref<1x4x6x256xf32, #tpu.memory_space<vmem>>, vector<1x1x2x256xf32>,
    %c0_13 = arith.constant 0 : index
    %c3 = arith.constant 3 : index
    %c0_14 = arith.constant 0 : index
    %c0_15 = arith.constant 0 : index
    %10 = vector.load %arg2[%c0_13, %c3, %c0_14, %c0_15] : memref<1x4x6x256xf32, #tpu.memory_space<vmem>>, vector<1x1x2x256xf32>
    %11 = vector.shape_cast %10 : vector<1x1x2x256xf32> to vector<2x256xf32>
    %c0_16 = arith.constant 0 : index
    %c2_17 = arith.constant 2 : index
    %c0_18 = arith.constant 0 : index
    %c0_19 = arith.constant 0 : index
    %12 = vector.load %arg3[%c0_16, %c2_17, %c0_18, %c0_19] : memref<1x4x6x256xf32, #tpu.memory_space<vmem>>, vector<1x1x2x256xf32>
    %13 = vector.shape_cast %12 : vector<1x1x2x256xf32> to vector<2x256xf32>
    %14 = vector.shape_cast %11 : vector<2x256xf32> to vector<1x1x2x256xf32>
    tpu.vector_store %arg3[%c0_16, %c2_17, %c0_18, %c0_19], %14 {strides = array<i32>} : memref<1x4x6x256xf32, #tpu.memory_space<vmem>>, vector<1x1x2x256xf32>,
    %cst = arith.constant 0.000000e+00 : f32
    %15 = vector.broadcast %cst : f32 to vector<2x256xf32>
    %c0_20 = arith.constant 0 : index
    %c3_21 = arith.constant 3 : index
    %c0_22 = arith.constant 0 : index
    %c0_23 = arith.constant 0 : index
    %16 = vector.load %arg3[%c0_20, %c3_21, %c0_22, %c0_23] : memref<1x4x6x256xf32, #tpu.memory_space<vmem>>, vector<1x1x2x256xf32>
    %17 = vector.shape_cast %16 : vector<1x1x2x256xf32> to vector<2x256xf32>
    %18 = vector.shape_cast %15 : vector<2x256xf32> to vector<1x1x2x256xf32>
    tpu.vector_store %arg3[%c0_20, %c3_21, %c0_22, %c0_23], %18 {strides = array<i32>} : memref<1x4x6x256xf32, #tpu.memory_space<vmem>>, vector<1x1x2x256xf32>,
    %c0_24 = arith.constant 0 : index
    %c0_25 = arith.constant 0 : index
    %c2_26 = arith.constant 2 : index
    %c0_27 = arith.constant 0 : index
    %19 = vector.load %arg2[%c0_24, %c0_25, %c2_26, %c0_27] : memref<1x4x6x256xf32, #tpu.memory_space<vmem>>, vector<1x1x2x256xf32>
    %20 = vector.shape_cast %19 : vector<1x1x2x256xf32> to vector<2x256xf32>
    %c0_28 = arith.constant 0 : index
    %c1_29 = arith.constant 1 : index
    %c2_30 = arith.constant 2 : index
    %c0_31 = arith.constant 0 : index
    %21 = vector.load %arg3[%c0_28, %c1_29, %c2_30, %c0_31] : memref<1x4x6x256xf32, #tpu.memory_space<vmem>>, vector<1x1x2x256xf32>
    %22 = vector.shape_cast %21 : vector<1x1x2x256xf32> to vector<2x256xf32>
    %23 = vector.shape_cast %20 : vector<2x256xf32> to vector<1x1x2x256xf32>
    tpu.vector_store %arg3[%c0_28, %c1_29, %c2_30, %c0_31], %23 {strides = array<i32>} : memref<1x4x6x256xf32, #tpu.memory_space<vmem>>, vector<1x1x2x256xf32>,
    %c0_32 = arith.constant 0 : index
    %c1_33 = arith.constant 1 : index
    %c2_34 = arith.constant 2 : index
    %c0_35 = arith.constant 0 : index
    %24 = vector.load %arg2[%c0_32, %c1_33, %c2_34, %c0_35] : memref<1x4x6x256xf32, #tpu.memory_space<vmem>>, vector<1x1x2x256xf32>
    %25 = vector.shape_cast %24 : vector<1x1x2x256xf32> to vector<2x256xf32>
    %c0_36 = arith.constant 0 : index
    %c2_37 = arith.constant 2 : index
    %c2_38 = arith.constant 2 : index
    %c0_39 = arith.constant 0 : index
    %26 = vector.load %arg3[%c0_36, %c2_37, %c2_38, %c0_39] : memref<1x4x6x256xf32, #tpu.memory_space<vmem>>, vector<1x1x2x256xf32>
    %27 = vector.shape_cast %26 : vector<1x1x2x256xf32> to vector<2x256xf32>
    %28 = vector.shape_cast %25 : vector<2x256xf32> to vector<1x1x2x256xf32>
    tpu.vector_store %arg3[%c0_36, %c2_37, %c2_38, %c0_39], %28 {strides = array<i32>} : memref<1x4x6x256xf32, #tpu.memory_space<vmem>>, vector<1x1x2x256xf32>,
    %c0_40 = arith.constant 0 : index
    %c2_41 = arith.constant 2 : index
    %c2_42 = arith.constant 2 : index
    %c0_43 = arith.constant 0 : index
    %29 = vector.load %arg2[%c0_40, %c2_41, %c2_42, %c0_43] : memref<1x4x6x256xf32, #tpu.memory_space<vmem>>, vector<1x1x2x256xf32>
    %30 = vector.shape_cast %29 : vector<1x1x2x256xf32> to vector<2x256xf32>
    %c0_44 = arith.constant 0 : index
    %c3_45 = arith.constant 3 : index
    %c2_46 = arith.constant 2 : index
    %c0_47 = arith.constant 0 : index
    %31 = vector.load %arg3[%c0_44, %c3_45, %c2_46, %c0_47] : memref<1x4x6x256xf32, #tpu.memory_space<vmem>>, vector<1x1x2x256xf32>
    %32 = vector.shape_cast %31 : vector<1x1x2x256xf32> to vector<2x256xf32>
    %33 = vector.shape_cast %30 : vector<2x256xf32> to vector<1x1x2x256xf32>
    tpu.vector_store %arg3[%c0_44, %c3_45, %c2_46, %c0_47], %33 {strides = array<i32>} : memref<1x4x6x256xf32, #tpu.memory_space<vmem>>, vector<1x1x2x256xf32>,
    %cst_48 = arith.constant 0.000000e+00 : f32
    %34 = vector.broadcast %cst_48 : f32 to vector<2x256xf32>
    %c0_49 = arith.constant 0 : index
    %c0_50 = arith.constant 0 : index
    %c2_51 = arith.constant 2 : index
    %c0_52 = arith.constant 0 : index
    %35 = vector.load %arg3[%c0_49, %c0_50, %c2_51, %c0_52] : memref<1x4x6x256xf32, #tpu.memory_space<vmem>>, vector<1x1x2x256xf32>
    %36 = vector.shape_cast %35 : vector<1x1x2x256xf32> to vector<2x256xf32>
    %37 = vector.shape_cast %34 : vector<2x256xf32> to vector<1x1x2x256xf32>
    tpu.vector_store %arg3[%c0_49, %c0_50, %c2_51, %c0_52], %37 {strides = array<i32>} : memref<1x4x6x256xf32, #tpu.memory_space<vmem>>, vector<1x1x2x256xf32>,
    %c0_53 = arith.constant 0 : index
    %c0_54 = arith.constant 0 : index
    %c4 = arith.constant 4 : index
    %c0_55 = arith.constant 0 : index
    %38 = vector.load %arg2[%c0_53, %c0_54, %c4, %c0_55] : memref<1x4x6x256xf32, #tpu.memory_space<vmem>>, vector<1x1x2x256xf32>
    %39 = vector.shape_cast %38 : vector<1x1x2x256xf32> to vector<2x256xf32>
    %c0_56 = arith.constant 0 : index
    %c0_57 = arith.constant 0 : index
    %c4_58 = arith.constant 4 : index
    %c0_59 = arith.constant 0 : index
    %40 = vector.load %arg3[%c0_56, %c0_57, %c4_58, %c0_59] : memref<1x4x6x256xf32, #tpu.memory_space<vmem>>, vector<1x1x2x256xf32>
    %41 = vector.shape_cast %40 : vector<1x1x2x256xf32> to vector<2x256xf32>
    %42 = vector.shape_cast %39 : vector<2x256xf32> to vector<1x1x2x256xf32>
    tpu.vector_store %arg3[%c0_56, %c0_57, %c4_58, %c0_59], %42 {strides = array<i32>} : memref<1x4x6x256xf32, #tpu.memory_space<vmem>>, vector<1x1x2x256xf32>,
    %c0_60 = arith.constant 0 : index
    %c1_61 = arith.constant 1 : index
    %c4_62 = arith.constant 4 : index
    %c0_63 = arith.constant 0 : index
    %43 = vector.load %arg2[%c0_60, %c1_61, %c4_62, %c0_63] : memref<1x4x6x256xf32, #tpu.memory_space<vmem>>, vector<1x1x2x256xf32>
    %44 = vector.shape_cast %43 : vector<1x1x2x256xf32> to vector<2x256xf32>
    %c0_64 = arith.constant 0 : index
    %c1_65 = arith.constant 1 : index
    %c4_66 = arith.constant 4 : index
    %c0_67 = arith.constant 0 : index
    %45 = vector.load %arg3[%c0_64, %c1_65, %c4_66, %c0_67] : memref<1x4x6x256xf32, #tpu.memory_space<vmem>>, vector<1x1x2x256xf32>
    %46 = vector.shape_cast %45 : vector<1x1x2x256xf32> to vector<2x256xf32>
    %47 = vector.shape_cast %44 : vector<2x256xf32> to vector<1x1x2x256xf32>
    tpu.vector_store %arg3[%c0_64, %c1_65, %c4_66, %c0_67], %47 {strides = array<i32>} : memref<1x4x6x256xf32, #tpu.memory_space<vmem>>, vector<1x1x2x256xf32>,
    %c0_68 = arith.constant 0 : index
    %c2_69 = arith.constant 2 : index
    %c4_70 = arith.constant 4 : index
    %c0_71 = arith.constant 0 : index
    %48 = vector.load %arg2[%c0_68, %c2_69, %c4_70, %c0_71] : memref<1x4x6x256xf32, #tpu.memory_space<vmem>>, vector<1x1x2x256xf32>
    %49 = vector.shape_cast %48 : vector<1x1x2x256xf32> to vector<2x256xf32>
    %c0_72 = arith.constant 0 : index
    %c2_73 = arith.constant 2 : index
    %c4_74 = arith.constant 4 : index
    %c0_75 = arith.constant 0 : index
    %50 = vector.load %arg3[%c0_72, %c2_73, %c4_74, %c0_75] : memref<1x4x6x256xf32, #tpu.memory_space<vmem>>, vector<1x1x2x256xf32>
    %51 = vector.shape_cast %50 : vector<1x1x2x256xf32> to vector<2x256xf32>
    %52 = vector.shape_cast %49 : vector<2x256xf32> to vector<1x1x2x256xf32>
    tpu.vector_store %arg3[%c0_72, %c2_73, %c4_74, %c0_75], %52 {strides = array<i32>} : memref<1x4x6x256xf32, #tpu.memory_space<vmem>>, vector<1x1x2x256xf32>,
    %c0_76 = arith.constant 0 : index
    %c3_77 = arith.constant 3 : index
    %c4_78 = arith.constant 4 : index
    %c0_79 = arith.constant 0 : index
    %53 = vector.load %arg2[%c0_76, %c3_77, %c4_78, %c0_79] : memref<1x4x6x256xf32, #tpu.memory_space<vmem>>, vector<1x1x2x256xf32>
    %54 = vector.shape_cast %53 : vector<1x1x2x256xf32> to vector<2x256xf32>
    %c0_80 = arith.constant 0 : index
    %c3_81 = arith.constant 3 : index
    %c4_82 = arith.constant 4 : index
    %c0_83 = arith.constant 0 : index
    %55 = vector.load %arg3[%c0_80, %c3_81, %c4_82, %c0_83] : memref<1x4x6x256xf32, #tpu.memory_space<vmem>>, vector<1x1x2x256xf32>
    %56 = vector.shape_cast %55 : vector<1x1x2x256xf32> to vector<2x256xf32>
    %57 = vector.shape_cast %54 : vector<2x256xf32> to vector<1x1x2x256xf32>
    tpu.vector_store %arg3[%c0_80, %c3_81, %c4_82, %c0_83], %57 {strides = array<i32>} : memref<1x4x6x256xf32, #tpu.memory_space<vmem>>, vector<1x1x2x256xf32>,
    return
  }
  func.func @transform_0(%arg0: i32, %arg1: i32) -> (i32, i32, i32, i32) {
    %c0_i32 = arith.constant 0 : i32
    %c0_i32_0 = arith.constant 0 : i32
    %c0_i32_1 = arith.constant 0 : i32
    return %arg0, %c0_i32, %c0_i32_0, %arg1 : i32, i32, i32, i32
  }
  func.func @transform_1(%arg0: i32, %arg1: i32) -> (i32, i32, i32, i32) {
    %c0_i32 = arith.constant 0 : i32
    %c0_i32_0 = arith.constant 0 : i32
    %c0_i32_1 = arith.constant 0 : i32
    return %arg0, %c0_i32, %c0_i32_0, %arg1 : i32, i32, i32, i32
  }
}

</mosaic_0001>

<llo_original>
// kernel: tpu_custom_call.1
$region0: #{tpu_custom_call.1}
  #allocation0 [shape = 'u32[]', space=smem, size = 0x4, offset = 0x4, fixed_abs, tag = 'smem constant byte address 0x4 - core index']
  #allocation1 [shape = 'u32[144,128]{1,0:T(1,128)}', space=vmem, size = 0x12000, scoped, tag = 'internal scratch']
  %s0 = inlined_call_operand.vmem [shape: f32[2,4,6,256], index: 0, kind: input, shape index: {}]
  %s1 = inlined_call_operand.vmem [shape: f32[2,4,6,256], index: 1, kind: output, shape index: {}]
  %s2 = sld [smem:[#allocation0]]
  $region37: #{tpu_custom_call.1} parent=0
    _
  %s4 = ssub.s32 1, %s2
  %s5 = scalar_select 0, %s4, %s2
  loop: start=0, step=1, limit=4
  $region2: #{tpu_custom_call.1} parent=0 // loop_pre_header
    _
  $region3: #{tpu_custom_call.1} parent=0 // loop_header
    %s7 = sphi 0, %s11
    %p8 = scmp.ge.s32.totalorder %s7, 4
    %s14 = sphi 0, %s26
    %s15 = sphi 0, %s22
    %s16 = sphi 0, %s14
    %s17 = sphi 0, %s15
    %s18 = sphi 0, %s16
    %s19 = sphi 0, %s17
    %s31 = sphi 0, %s33
    %s34 = sphi 0, %s31
    %s35 = sphi 0, %s34
    %s51 = sphi 0, %s35
    %s59 = sphi 0, %s61
    %s62 = sphi 0, %s59
    %s63 = sphi 0, %s62
    %s79 = sphi 0, %s63
  $region4: #{tpu_custom_call.1} parent=0 // loop_header_branch
    %10 = sbr.rel (%p8) target = $region8
  $region5: #{tpu_custom_call.1} parent=0 // loop_body
    %s12 = ssub.s32 %s7, 1
    %s13 = ssub.s32 %s7, 2
    %s20 = sadd.s32 1, %s15
    %p21 = scmp.ge.s32.totalorder %s20, 1
    %s22 = scalar_select %p21, 0, %s20
    %s23 = sadd.s32 1, %s14
    %s24 = scalar_select %p21, %s23, %s14
    %p25 = scmp.ge.s32.totalorder %s24, 2
    %s26 = scalar_select %p25, 0, %s24
    %s27 = ssub.s32 %s14, %s26
    %s28 = ssub.s32 %s15, %s22
    %s29 = sor.u32 %s27, %s28
    %p30 = scmp.eq.s32.totalorder %s29, 0
    %s32 = sadd.s32 %s31, 1
    %s33 = scalar_select %p30, %s31, %s32
    %p36 = pneg %p30
    %p37 = scmp.eq.s32.totalorder %s7, 1
    %p38 = por %p36, %p37
    %p39 = scmp.ne.s32.totalorder %s31, %s34
    %p40 = scmp.eq.s32.totalorder %s7, 0
    %p41 = por %p39, %p40
    %p42 = scmp.ne.s32.totalorder %s31, %s34
    %p43 = scmp.eq.s32.totalorder %s12, 1
    %p44 = por %p42, %p43
    %p45 = scmp.ne.s32.totalorder %s34, %s35
    %p46 = scmp.eq.s32.totalorder %s12, 0
    %p47 = por %p45, %p46
    %p48 = scmp.ne.s32.totalorder %s34, %s35
    %p49 = scmp.eq.s32.totalorder %s13, 1
    %p50 = por %p48, %p49
    %p52 = scmp.ne.s32.totalorder %s35, %s51
    %p53 = scmp.eq.s32.totalorder %s13, 0
    %p54 = por %p52, %p53
    %s55 = ssub.s32 %s14, %s26
    %s56 = ssub.s32 %s15, %s22
    %s57 = sor.u32 %s55, %s56
    %p58 = scmp.eq.s32.totalorder %s57, 0
    %s60 = sadd.s32 %s59, 1
    %s61 = scalar_select %p58, %s59, %s60
    %p64 = pneg %p58
    %p65 = scmp.eq.s32.totalorder %s7, 1
    %p66 = por %p64, %p65
    %p67 = scmp.ne.s32.totalorder %s59, %s62
    %p68 = scmp.eq.s32.totalorder %s7, 0
    %p69 = por %p67, %p68
    %p70 = scmp.ne.s32.totalorder %s59, %s62
    %p71 = scmp.eq.s32.totalorder %s12, 1
    %p72 = por %p70, %p71
    %p73 = scmp.ne.s32.totalorder %s62, %s63
    %p74 = scmp.eq.s32.totalorder %s12, 0
    %p75 = por %p73, %p74
    %p76 = scmp.ne.s32.totalorder %s62, %s63
    %p77 = scmp.eq.s32.totalorder %s13, 1
    %p78 = por %p76, %p77
    %p80 = scmp.ne.s32.totalorder %s63, %s79
    %p81 = scmp.eq.s32.totalorder %s13, 0
    %p82 = por %p80, %p81
    %p83 = scmp.le.s32.totalorder 1, %s7
    %p84 = scmp.lt.s32.totalorder %s7, 3
    %p85 = pnand %p83, %p84
    %p86 = pneg %p85
    // Predicated region
    $region9: #{tpu_custom_call.1} parent=5 // pred_check
      _
    $region10: #{tpu_custom_call.1} parent=5 // pred_check_branch
      %88 = sbr.rel (%p85) target = $region12
    $region11: #{tpu_custom_call.1} parent=5 // pred_region
      %s89 = ssub.s32 %s7, 1
    $region12: #{tpu_custom_call.1} parent=5 // pred_fallthru
      _
    %p90 = scmp.lt.s32.totalorder %s7, 2
    // Predicated region
    $region13: #{tpu_custom_call.1} parent=5 // pred_check
      %p91 = pneg %p90
    $region14: #{tpu_custom_call.1} parent=5 // pred_check_branch
      %93 = sbr.rel (%p91) target = $region16
    $region15: #{tpu_custom_call.1} parent=5 // pred_region
      // Predicated region
      $region17: #{tpu_custom_call.1} parent=15 // pred_check
        %p94 = pneg %p41
      $region18: #{tpu_custom_call.1} parent=15 // pred_check_branch
        %96 = sbr.rel (%p94) target = $region20
      $region19: #{tpu_custom_call.1} parent=15 // pred_region
        %s97 = smul.u32 2, %s15
        %p98 = scmp.lt.s32.totalorder %s14, 1
        %s99 = scalar_select %p98, %s14, 1
        %p100 = scmp.lt.s32.totalorder %s97, 1
        %s101 = scalar_select %p100, %s97, 1
        %s102 = smul.addr %s99, 8
        %s103 = sadd.s32 %s101, %s102
        %s104 = smul.addr %s103, 8
        %s105 = scalar_lea.vmem %s0, %s104
        %s106 = smul.u32 2, %s15
      $region20: #{tpu_custom_call.1} parent=15 // pred_fallthru
        _
    $region16: #{tpu_custom_call.1} parent=5 // pred_fallthru
      _
    %p107 = scmp.le.s32.totalorder 1, %s7
    %p108 = scmp.lt.s32.totalorder %s7, 3
    %p109 = pnand %p107, %p108
    %p110 = pneg %p109
    // Predicated region
    $region21: #{tpu_custom_call.1} parent=5 // pred_check
      _
    $region22: #{tpu_custom_call.1} parent=5 // pred_check_branch
      %112 = sbr.rel (%p109) target = $region24
    $region23: #{tpu_custom_call.1} parent=5 // pred_region
      %s113 = ssub.s32 %s7, 1
      %s114 = smul.u32 2, %s17
      %p115 = scmp.lt.s32.totalorder %s16, 1
      %s116 = scalar_select %p115, %s16, 1
      %p117 = scmp.lt.s32.totalorder %s114, 1
      %s118 = scalar_select %p117, %s114, 1
      %s119 = smul.addr %s116, 8
      %s120 = sadd.s32 %s118, %s119
      %s121 = smul.addr %s120, 8
      %s122 = scalar_lea.vmem %s0, %s121
      %p123 = pneg %p47
      %p124 = pneg %p44
      %p125 = pneg %p75
      %p126 = pneg %p72
      %s127 = smul.u32 2, %s17
      %p128 = scmp.lt.s32.totalorder %s16, 1
      %s129 = scalar_select %p128, %s16, 1
      %p130 = scmp.lt.s32.totalorder %s127, 1
      %s131 = scalar_select %p130, %s127, 1
      %s132 = smul.addr %s129, 8
      %s133 = sadd.s32 %s131, %s132
      %s134 = smul.addr %s133, 8
      %s135 = scalar_lea.vmem %s1, %s134
      %s136 = smul.u32 2, %s17
      %p137 = scmp.lt.s32.totalorder %s16, 1
      %s138 = scalar_select %p137, %s16, 1
      %p139 = scmp.lt.s32.totalorder %s136, 1
      %s140 = scalar_select %p139, %s136, 1
      %s141 = smul.addr %s138, 8
      %s142 = sadd.s32 %s140, %s141
      %s143 = smul.addr %s142, 8
      %s144 = scalar_lea.vmem %s0, %s143
      %s145 = smul.u32 2, %s17
      %s146 = smul.u32 2, %s17
      %p147 = scmp.lt.s32.totalorder %s16, 1
      %s148 = scalar_select %p147, %s16, 1
      %p149 = scmp.lt.s32.totalorder %s146, 1
      %s150 = scalar_select %p149, %s146, 1
      %s151 = smul.addr %s148, 8
      %s152 = sadd.s32 %s150, %s151
      %s153 = smul.addr %s152, 8
      %s154 = scalar_lea.vmem %s1, %s153
      %s155 = smul.u32 2, %s17
      %s156 = scalar_lea.vmem %s144, 16
      %v157 = vld [vmem:[%s156] sm:$0x3]
      %v158 = vld [vmem:[%s156 + $0x8] sm:$0x3]
      %159 = vst [vmem:[%s154] sm:$0x3] %v157
      %160 = vst [vmem:[%s154 + $0x8] sm:$0x3] %v158
      %s161 = scalar_lea.vmem %s144, 32
      %v162 = vld [vmem:[%s161] sm:$0x3]
      %v163 = vld [vmem:[%s161 + $0x8] sm:$0x3]
      %s164 = scalar_lea.vmem %s154, 16
      %165 = vst [vmem:[%s164] sm:$0x3] %v162
      %166 = vst [vmem:[%s164 + $0x8] sm:$0x3] %v163
      %s167 = scalar_lea.vmem %s144, 48
      %v168 = vld [vmem:[%s167] sm:$0x3]
      %v169 = vld [vmem:[%s167 + $0x8] sm:$0x3]
      %s170 = scalar_lea.vmem %s154, 32
      %171 = vst [vmem:[%s170] sm:$0x3] %v168
      %172 = vst [vmem:[%s170 + $0x8] sm:$0x3] %v169
      %s173 = scalar_lea.vmem %s154, 48
      %174 = vst [vmem:[%s173] sm:$0x3] 0.0
      %175 = vst [vmem:[%s173 + $0x8] sm:$0x3] 0.0
      %v176 = vld [vmem:[%s144] sm:$0xc]
      %v177 = vld [vmem:[%s144 + $0x8] sm:$0xc]
      %178 = vst [vmem:[%s164] sm:$0xc] %v176
      %179 = vst [vmem:[%s164 + $0x8] sm:$0xc] %v177
      %v180 = vld [vmem:[%s156] sm:$0xc]
      %v181 = vld [vmem:[%s156 + $0x8] sm:$0xc]
      %182 = vst [vmem:[%s170] sm:$0xc] %v180
      %183 = vst [vmem:[%s170 + $0x8] sm:$0xc] %v181
      %v184 = vld [vmem:[%s161] sm:$0xc]
      %v185 = vld [vmem:[%s161 + $0x8] sm:$0xc]
      %186 = vst [vmem:[%s173] sm:$0xc] %v184
      %187 = vst [vmem:[%s173 + $0x8] sm:$0xc] %v185
      %188 = vst [vmem:[%s154] sm:$0xc] 0.0
      %189 = vst [vmem:[%s154 + $0x8] sm:$0xc] 0.0
      %v190 = vld [vmem:[%s144] sm:$0x30]
      %v191 = vld [vmem:[%s144 + $0x8] sm:$0x30]
      %192 = vst [vmem:[%s154] sm:$0x30] %v190
      %193 = vst [vmem:[%s154 + $0x8] sm:$0x30] %v191
      %v194 = vld [vmem:[%s156] sm:$0x30]
      %v195 = vld [vmem:[%s156 + $0x8] sm:$0x30]
      %196 = vst [vmem:[%s164] sm:$0x30] %v194
      %197 = vst [vmem:[%s164 + $0x8] sm:$0x30] %v195
      %v198 = vld [vmem:[%s161] sm:$0x30]
      %v199 = vld [vmem:[%s161 + $0x8] sm:$0x30]
      %200 = vst [vmem:[%s170] sm:$0x30] %v198
      %201 = vst [vmem:[%s170 + $0x8] sm:$0x30] %v199
      %v202 = vld [vmem:[%s167] sm:$0x30]
      %v203 = vld [vmem:[%s167 + $0x8] sm:$0x30]
      %204 = vst [vmem:[%s173] sm:$0x30] %v202
      %205 = vst [vmem:[%s173 + $0x8] sm:$0x30] %v203
      %s206 = smul.u32 2, %s17
      %p207 = scmp.lt.s32.totalorder %s16, 1
      %s208 = scalar_select %p207, %s16, 1
      %p209 = scmp.lt.s32.totalorder %s206, 1
      %s210 = scalar_select %p209, %s206, 1
      %s211 = smul.addr %s208, 8
      %s212 = sadd.s32 %s210, %s211
      %s213 = smul.addr %s212, 8
      %s214 = scalar_lea.vmem %s1, %s213
      // Predicated region
      $region25: #{tpu_custom_call.1} parent=23 // pred_check
        %p215 = pneg %p72
      $region26: #{tpu_custom_call.1} parent=23 // pred_check_branch
        %217 = sbr.rel (%p215) target = $region28
      $region27: #{tpu_custom_call.1} parent=23 // pred_region
        %s218 = smul.u32 2, %s17
      $region28: #{tpu_custom_call.1} parent=23 // pred_fallthru
        _
    $region24: #{tpu_custom_call.1} parent=5 // pred_fallthru
      _
    %p219 = scmp.le.s32.totalorder 2, %s7
    // Predicated region
    $region29: #{tpu_custom_call.1} parent=5 // pred_check
      %p220 = pneg %p219
    $region30: #{tpu_custom_call.1} parent=5 // pred_check_branch
      %222 = sbr.rel (%p220) target = $region32
    $region31: #{tpu_custom_call.1} parent=5 // pred_region
      %s223 = ssub.s32 %s7, 2
      // Predicated region
      $region33: #{tpu_custom_call.1} parent=31 // pred_check
        %p224 = pneg %p78
      $region34: #{tpu_custom_call.1} parent=31 // pred_check_branch
        %226 = sbr.rel (%p224) target = $region36
      $region35: #{tpu_custom_call.1} parent=31 // pred_region
        %s227 = smul.u32 2, %s19
        %p228 = scmp.lt.s32.totalorder %s18, 1
        %s229 = scalar_select %p228, %s18, 1
        %p230 = scmp.lt.s32.totalorder %s227, 1
        %s231 = scalar_select %p230, %s227, 1
        %s232 = smul.addr %s229, 8
        %s233 = sadd.s32 %s231, %s232
        %s234 = smul.addr %s233, 8
        %s235 = scalar_lea.vmem %s1, %s234
      $region36: #{tpu_custom_call.1} parent=31 // pred_fallthru
        _
    $region32: #{tpu_custom_call.1} parent=5 // pred_fallthru
      _
  $region6: #{tpu_custom_call.1} parent=0 // loop_footer
    %s11 = sadd.s32 1, %s7
  $region7: #{tpu_custom_call.1} parent=0 // loop_footer_branch
    %6 = sbr.rel target = $region3
  $region8: #{tpu_custom_call.1} parent=0 // loop_exit
    _

</llo_original>
